<compile_context>
chip_gen: v7x
topology: tpu7x:2x2x1
jax: 0.10.0
libtpu: 0.0.40
codegen_flags: <defaults>
</compile_context>

<pallas_src>
import math

import jax
import jax.numpy as jnp
from jax.experimental import pallas as pl
from jax.experimental.pallas import tpu as pltpu


# ----------------------------------------------------------------------------
# "CannedNet" spec interpretation (glue, plain Python/JAX — mirrors
# CannedNet._interpret_element / NoInputSpec lazy parameter creation).
# ----------------------------------------------------------------------------
def _relu(v):
    return jnp.maximum(v, 0.0)


HIDDEN_BLOCKS = (32, _relu, 16, jnp.tanh, 8)

# TODO(synk): arbitrary nn.Module elements of hidden_blocks (anything beyond
# ints and elementwise callables) are not interpreted here.


def build_canned_net(hidden_blocks, in_features, key, dtype=jnp.float32):
    """Interpret hidden_blocks and create parameters (PyTorch-default init:
    U(-1/sqrt(fan_in), 1/sqrt(fan_in)) for both weight and bias)."""
    ops = []            # list of ("linear", None) or ("lambda", fn)
    params = []         # flat list, interleaved (W, b) per linear; W is (in, out)
    cur = in_features
    for elem in hidden_blocks:
        if isinstance(elem, int):
            if elem < 1:
                raise ValueError(
                    f'Integers specifying layer sizes must be >= 1. Given {elem}.')
            key, kw, kb = jax.random.split(key, 3)
            bound = 1.0 / math.sqrt(cur)
            # torch Linear weight is (out, in); store transposed (in, out).
            w = jax.random.uniform(kw, (cur, elem), dtype, -bound, bound)
            b = jax.random.uniform(kb, (1, elem), dtype, -bound, bound)
            params.extend([w, b])
            ops.append(("linear", None))
            cur = elem
        elif callable(elem):
            ops.append(("lambda", elem))
        else:
            raise ValueError(
                f'Element {elem} of type {type(elem)} was not understood.')
    return ops, params, cur


# ----------------------------------------------------------------------------
# Pallas kernel: fused Linear(+bias) / activation chain over one batch tile.
# Params arrive as packed (in+1, out) slabs: rows [:-1] = W, row [-1] = bias.
# ----------------------------------------------------------------------------
def make_canned_net_kernel(ops, n_linear):
    def kernel(*refs):
        x_ref = refs[0]
        wb_refs = refs[1:1 + n_linear]
        o_ref = refs[1 + n_linear]

        h = x_ref[...].astype(jnp.float32)
        li = 0
        for kind, fn in ops:
            if kind == "linear":
                wb = wb_refs[li][...]
                li += 1
                # MXU matmul with f32 accumulation; bias broadcast over rows.
                h = jnp.dot(h, wb[:-1, :],
                            preferred_element_type=jnp.float32) + wb[-1:, :]
            else:  # "lambda" (elementwise)
                h = fn(h)
        o_ref[...] = h.astype(o_ref.dtype)

    return kernel


def canned_net_forward(x, ops, params, out_features, *, tile_b=512,
                       lane_pad=128):
    """Run the fused CannedNet forward. Returns (B, out_features)."""
    B, F = x.shape
    n_linear = sum(1 for kind, _ in ops if kind == "linear")

    # Lane-dense output width (>= 128, multiple of 128) for unmasked stores.
    padded_out = max(lane_pad, pl.cdiv(out_features, lane_pad) * lane_pad)

    # Pack each (W, b) into a single (in+1, out) slab; zero-pad the LAST
    # linear layer's output dim to `padded_out`.  Any trailing elementwise
    # lambdas act harmlessly on the padding columns, which are sliced off.
    packed = []
    p = 0
    li = 0
    for kind, _ in ops:
        if kind != "linear":
            continue
        w, b = params[p], params[p + 1]
        p += 2
        li += 1
        if li == n_linear:
            w = jnp.pad(w, ((0, 0), (0, padded_out - w.shape[1])))
            b = jnp.pad(b, ((0, 0), (0, padded_out - b.shape[1])))
        packed.append(jnp.concatenate([w, b], axis=0))

    tile_b = min(tile_b, B)
    grid = (pl.cdiv(B, tile_b),)

    kernel = make_canned_net_kernel(ops, n_linear)

    in_specs = [pl.BlockSpec((tile_b, F), lambda i: (i, 0))]
    # Params: full-array blocks, same block index every step -> fetched once,
    # stay resident in VMEM across the batch grid.
    for wb in packed:
        in_specs.append(pl.BlockSpec(wb.shape, lambda i: (0, 0)))

    out_padded = pl.pallas_call(
        kernel,
        out_shape=jax.ShapeDtypeStruct((B, padded_out), x.dtype),
        grid=grid,
        in_specs=in_specs,
        out_specs=pl.BlockSpec((tile_b, padded_out), lambda i: (i, 0)),
        compiler_params=pltpu.CompilerParams(
            dimension_semantics=("parallel",)),
    )(x, *packed)

    return out_padded[:, :out_features]


# ----------------------------------------------------------------------------
# Pure-JAX reference (sanity check).
# ----------------------------------------------------------------------------
def canned_net_reference(x, ops, params):
    h = x.astype(jnp.float32)
    p = 0
    for kind, fn in ops:
        if kind == "linear":
            w, b = params[p], params[p + 1]
            p += 2
            h = h @ w + b
        else:
            h = fn(h)
    return h.astype(x.dtype)


if __name__ == "__main__":
    key = jax.random.PRNGKey(0)
    k_x1, k_x2, k_p = jax.random.split(key, 3)

    in_features = 16
    ops, params, out_features = build_canned_net(
        HIDDEN_BLOCKS, in_features, k_p)

    # Small, spec-scale batch.
    batch = 8
    x_small = jax.random.normal(k_x1, (batch, in_features), jnp.float32)
    out_small = jax.block_until_ready(
        canned_net_forward(x_small, ops, params, out_features))
    ref_small = canned_net_reference(x_small, ops, params)
    assert out_small.shape == (batch, out_features), out_small.shape
    assert jnp.allclose(out_small, ref_small, atol=1e-5, rtol=1e-5), \
        "small-batch mismatch vs reference"

    # Larger batch exercising the batch grid, pipelining, and a ragged tail
    # tile (1064 = 2*512 + 40).
    big_batch = 1064
    x_big = jax.random.normal(k_x2, (big_batch, in_features), jnp.float32)
    out_big = jax.block_until_ready(
        canned_net_forward(x_big, ops, params, out_features))
    ref_big = canned_net_reference(x_big, ops, params)
    assert out_big.shape == (big_batch, out_features), out_big.shape
    assert jnp.allclose(out_big, ref_big, atol=1e-5, rtol=1e-5), \
        "large-batch mismatch vs reference"

    print("KERNEL_OK")
</pallas_src>

<mosaic_0001>
module attributes {stable_mosaic.version = 11 : i64} {
  func.func @kernel(%arg0: i32, %arg1: memref<8x16xf32, #tpu.memory_space<vmem>>, %arg2: memref<17x32xf32, #tpu.memory_space<vmem>>, %arg3: memref<33x16xf32, #tpu.memory_space<vmem>>, %arg4: memref<17x128xf32, #tpu.memory_space<vmem>>, %arg5: memref<8x128xf32, #tpu.memory_space<vmem>>) attributes {dimension_semantics = [#tpu.dimension_semantics<parallel>], iteration_bounds = array<i64: 1>, scalar_prefetch = 0 : i64, scratch_operands = 0 : i64, tpu.core_type = #tpu.core_type<tc>, window_params = [{transform_indices = @transform_0, window_bounds = array<i64: 8, 16>}, {pipeline_mode = #tpu.pipeline_mode<synchronous>, transform_indices = @transform_1, window_bounds = array<i64: 17, 32>}, {pipeline_mode = #tpu.pipeline_mode<synchronous>, transform_indices = @transform_2, window_bounds = array<i64: 33, 16>}, {pipeline_mode = #tpu.pipeline_mode<synchronous>, transform_indices = @transform_3, window_bounds = array<i64: 17, 128>}, {transform_indices = @transform_4, window_bounds = array<i64: 8, 128>}]} {
    %c0 = arith.constant 0 : index
    %c0_0 = arith.constant 0 : index
    %0 = vector.load %arg1[%c0, %c0_0] : memref<8x16xf32, #tpu.memory_space<vmem>>, vector<8x16xf32>
    %c0_1 = arith.constant 0 : index
    %c0_2 = arith.constant 0 : index
    %1 = vector.load %arg2[%c0_1, %c0_2] : memref<17x32xf32, #tpu.memory_space<vmem>>, vector<17x32xf32>
    %2 = vector.extract_strided_slice %1 {offsets = [0, 0], sizes = [16, 32], strides = [1, 1]} : vector<17x32xf32> to vector<16x32xf32>
    %cst = arith.constant dense<0.000000e+00> : vector<8x32xf32>
    %3 = tpu.matmul %0, %2, %cst {dimension_numbers = #tpu.dot_dimension_numbers<[1], [0], [0], [1], [0, 0, 1, 1], [], []>} : vector<8x16xf32>, vector<16x32xf32>, vector<8x32xf32> -> vector<8x32xf32>
    %4 = vector.extract_strided_slice %1 {offsets = [16, 0], sizes = [1, 32], strides = [1, 1]} : vector<17x32xf32> to vector<1x32xf32>
    %5 = vector.broadcast %4 : vector<1x32xf32> to vector<8x32xf32>
    %6 = arith.addf %3, %5 : vector<8x32xf32>
    %cst_3 = arith.constant 0.000000e+00 : f32
    %7 = vector.broadcast %cst_3 : f32 to vector<8x32xf32>
    %8 = arith.maximumf %6, %7 : vector<8x32xf32>
    %c0_4 = arith.constant 0 : index
    %c0_5 = arith.constant 0 : index
    %9 = vector.load %arg3[%c0_4, %c0_5] : memref<33x16xf32, #tpu.memory_space<vmem>>, vector<33x16xf32>
    %10 = vector.extract_strided_slice %9 {offsets = [0, 0], sizes = [32, 16], strides = [1, 1]} : vector<33x16xf32> to vector<32x16xf32>
    %cst_6 = arith.constant dense<0.000000e+00> : vector<8x16xf32>
    %11 = tpu.matmul %8, %10, %cst_6 {dimension_numbers = #tpu.dot_dimension_numbers<[1], [0], [0], [1], [0, 0, 1, 1], [], []>} : vector<8x32xf32>, vector<32x16xf32>, vector<8x16xf32> -> vector<8x16xf32>
    %12 = vector.extract_strided_slice %9 {offsets = [32, 0], sizes = [1, 16], strides = [1, 1]} : vector<33x16xf32> to vector<1x16xf32>
    %13 = vector.broadcast %12 : vector<1x16xf32> to vector<8x16xf32>
    %14 = arith.addf %11, %13 : vector<8x16xf32>
    %15 = math.tanh %14 : vector<8x16xf32>
    %c0_7 = arith.constant 0 : index
    %c0_8 = arith.constant 0 : index
    %16 = vector.load %arg4[%c0_7, %c0_8] : memref<17x128xf32, #tpu.memory_space<vmem>>, vector<17x128xf32>
    %17 = vector.extract_strided_slice %16 {offsets = [0, 0], sizes = [16, 128], strides = [1, 1]} : vector<17x128xf32> to vector<16x128xf32>
    %cst_9 = arith.constant dense<0.000000e+00> : vector<8x128xf32>
    %18 = tpu.matmul %15, %17, %cst_9 {dimension_numbers = #tpu.dot_dimension_numbers<[1], [0], [0], [1], [0, 0, 1, 1], [], []>} : vector<8x16xf32>, vector<16x128xf32>, vector<8x128xf32> -> vector<8x128xf32>
    %19 = vector.extract_strided_slice %16 {offsets = [16, 0], sizes = [1, 128], strides = [1, 1]} : vector<17x128xf32> to vector<1x128xf32>
    %20 = vector.broadcast %19 : vector<1x128xf32> to vector<8x128xf32>
    %21 = arith.addf %18, %20 : vector<8x128xf32>
    %c0_10 = arith.constant 0 : index
    %c0_11 = arith.constant 0 : index
    %22 = vector.load %arg5[%c0_10, %c0_11] : memref<8x128xf32, #tpu.memory_space<vmem>>, vector<8x128xf32>
    tpu.vector_store %arg5[%c0_10, %c0_11], %21 {strides = array<i32>} : memref<8x128xf32, #tpu.memory_space<vmem>>, vector<8x128xf32>,
    return
  }
  func.func @transform_0(%arg0: i32) -> (i32, i32) {
    %c0_i32 = arith.constant 0 : i32
    %c0_i32_0 = arith.constant 0 : i32
    return %arg0, %c0_i32 : i32, i32
  }
  func.func @transform_1(%arg0: i32) -> (i32, i32) {
    %c0_i32 = arith.constant 0 : i32
    %c0_i32_0 = arith.constant 0 : i32
    %c0_i32_1 = arith.constant 0 : i32
    return %c0_i32, %c0_i32_0 : i32, i32
  }
  func.func @transform_2(%arg0: i32) -> (i32, i32) {
    %c0_i32 = arith.constant 0 : i32
    %c0_i32_0 = arith.constant 0 : i32
    %c0_i32_1 = arith.constant 0 : i32
    return %c0_i32, %c0_i32_0 : i32, i32
  }
  func.func @transform_3(%arg0: i32) -> (i32, i32) {
    %c0_i32 = arith.constant 0 : i32
    %c0_i32_0 = arith.constant 0 : i32
    %c0_i32_1 = arith.constant 0 : i32
    return %c0_i32, %c0_i32_0 : i32, i32
  }
  func.func @transform_4(%arg0: i32) -> (i32, i32) {
    %c0_i32 = arith.constant 0 : i32
    %c0_i32_0 = arith.constant 0 : i32
    return %arg0, %c0_i32 : i32, i32
  }
}

</mosaic_0001>

<llo_original>
// kernel: tpu_custom_call.1
$region0: #{tpu_custom_call.1}
  #allocation0 [shape = 'u32[]', space=smem, size = 0x4, offset = 0x4, fixed_abs, tag = 'smem constant byte address 0x4 - core index']
  #allocation1 [shape = 'u32[144,128]{1,0:T(1,128)}', space=vmem, size = 0x12000, scoped, tag = 'internal scratch']
  %s0 = inlined_call_operand.vmem [shape: f32[8,16], index: 0, kind: input, shape index: {}]
  %s1 = inlined_call_operand.vmem [shape: f32[17,32], index: 1, kind: input, shape index: {}]
  %s2 = inlined_call_operand.vmem [shape: f32[33,16], index: 2, kind: input, shape index: {}]
  %s3 = inlined_call_operand.vmem [shape: f32[17,128], index: 3, kind: input, shape index: {}]
  %s4 = inlined_call_operand.hbm [shape: f32[8,128], index: 4, kind: output, shape index: {}]
  %s5 = sld [smem:[#allocation0]]
  $region26: #{tpu_custom_call.1} parent=0
    _
  %s7 = ssub.s32 1, %s5
  %s8 = scalar_select 0, %s7, %s5
  $region1: #{tpu_custom_call.1} parent=0
    #allocation2 [shape = 'u8[4096]{0}', space=vmem, size = 0x1000, scoped, tag = 'output window, operand 0, single buffered']
    #allocation3 [shape = 's32[1]{0}', space=sflag, size = 0x4, scoped, tag = 'scoped memory for tpu_custom_call.1']
    %9 = vsyncpa [#allocation3], 0
    // Predicated region
    $region2: #{tpu_custom_call.1} parent=1 // pred_check
      _
    $region3: #{tpu_custom_call.1} parent=1 // pred_check_branch
      %11 = sbr.rel (0) target = $region5
    $region4: #{tpu_custom_call.1} parent=1 // pred_region
      _
    $region5: #{tpu_custom_call.1} parent=1 // pred_fallthru
      _
    // Predicated region
    $region6: #{tpu_custom_call.1} parent=1 // pred_check
      _
    $region7: #{tpu_custom_call.1} parent=1 // pred_check_branch
      %13 = sbr.rel (0) target = $region9
    $region8: #{tpu_custom_call.1} parent=1 // pred_region
      _
    $region9: #{tpu_custom_call.1} parent=1 // pred_fallthru
      _
    // Predicated region
    $region10: #{tpu_custom_call.1} parent=1 // pred_check
      _
    $region11: #{tpu_custom_call.1} parent=1 // pred_check_branch
      %15 = sbr.rel (0) target = $region13
    $region12: #{tpu_custom_call.1} parent=1 // pred_region
      _
    $region13: #{tpu_custom_call.1} parent=1 // pred_fallthru
      _
    // Predicated region
    $region14: #{tpu_custom_call.1} parent=1 // pred_check
      _
    $region15: #{tpu_custom_call.1} parent=1 // pred_check_branch
      %17 = sbr.rel (0) target = $region17
    $region16: #{tpu_custom_call.1} parent=1 // pred_region
      _
    $region17: #{tpu_custom_call.1} parent=1 // pred_fallthru
      _
    %v18 = vld [vmem:[%s0] sm:$0xff]
    %v19 = vld [vmem:[%s1] sm:$0xff]
    %v20 = vld [vmem:[%s1 + $0x8] sm:$0xff]
    %v21 = vld [vmem:[%s1 + $0x10] sm:$0x1]
    %v22 = vlaneseq
    %v23 = vshrl.u32 %v22, 7
    %v24 = vsub.s32 0, %v23
    %v25 = vrot.slane %v21, %v24
    %vm26 = vcmask 130048
    %v28 = vsel %vm26, %v18, 0
    %30 = vmatprep.subr.mxu0 0.0
    %31 = vmatpush1.msra.mxu0 %v19
    %32 = vmatprep.subr.mxu0 0.0
    %33 = vmatpush1.msra.mxu0 %v20
    %34 = vmatprep.subr.mxu0 0.0
    %35 = vmatpush1.msra.mxu0 0.0
    %36 = vmatprep.subr.mxu0 0.0
    %37 = vmatpush1.msra.mxu0 0.0
    %38 = vmatprep.subr.mxu0 0.0
    %39 = vmatpush1.msra.mxu0 0.0
    %40 = vmatprep.subr.mxu0 0.0
    %41 = vmatpush1.msra.mxu0 0.0
    %42 = vmatprep.subr.mxu0 0.0
    %43 = vmatpush1.msra.mxu0 0.0
    %44 = vmatprep.subr.mxu0 0.0
    %45 = vmatpush1.msra.mxu0 0.0
    %46 = vmatprep.subr.mxu0 0.0
    %47 = vmatpush1.msra.mxu0 0.0
    %48 = vmatprep.subr.mxu0 0.0
    %49 = vmatpush1.msra.mxu0 0.0
    %50 = vmatprep.subr.mxu0 0.0
    %51 = vmatpush1.msra.mxu0 0.0
    %52 = vmatprep.subr.mxu0 0.0
    %53 = vmatpush1.msra.mxu0 0.0
    %54 = vmatprep.subr.mxu0 0.0
    %55 = vmatpush1.msra.mxu0 0.0
    %56 = vmatprep.subr.mxu0 0.0
    %57 = vmatpush1.msra.mxu0 0.0
    %58 = vmatprep.subr.mxu0 0.0
    %59 = vmatpush1.msra.mxu0 0.0
    %60 = vmatprep.subr.mxu0 0.0
    %61 = vmatpush1.msra.mxu0 0.0
    %62 = vmatprep.subr.mxu0 0.0
    %63 = vmatpush1.msra.mxu0 0.0
    %64 = vmatprep.subr.mxu0 0.0
    %65 = vmatpush1.msra.mxu0 0.0
    %66 = vmatprep.subr.mxu0 0.0
    %67 = vmatpush1.msra.mxu0 0.0
    %68 = vmatprep.subr.mxu0 0.0
    %69 = vmatpush1.msra.mxu0 0.0
    %70 = vmatprep.subr.mxu0 0.0
    %71 = vmatpush1.msra.mxu0 0.0
    %72 = vmatprep.subr.mxu0 0.0
    %73 = vmatpush1.msra.mxu0 0.0
    %74 = vmatprep.subr.mxu0 0.0
    %75 = vmatpush1.msra.mxu0 0.0
    %76 = vmatprep.subr.mxu0 0.0
    %77 = vmatpush1.msra.mxu0 0.0
    %78 = vmatprep.subr.mxu0 0.0
    %79 = vmatpush1.msra.mxu0 0.0
    %80 = vmatprep.subr.mxu0 0.0
    %81 = vmatpush1.msra.mxu0 0.0
    %82 = vmatprep.subr.mxu0 0.0
    %83 = vmatpush1.msra.mxu0 0.0
    %84 = vmatprep.subr.mxu0 0.0
    %85 = vmatpush1.msra.mxu0 0.0
    %86 = vmatprep.subr.mxu0 0.0
    %87 = vmatpush1.msra.mxu0 0.0
    %88 = vmatprep.subr.mxu0 0.0
    %89 = vmatpush1.msra.mxu0 0.0
    %90 = vmatprep.subr.mxu0 0.0
    %91 = vmatpush1.msra.mxu0 0.0
    %92 = vmatprep.subr.mxu0 0.0
    %93 = vmatpush1.msra.mxu0 0.0
    %94 = vmatprep.mubr.f32.mxu0 0.0
    %95 = vmatmul.mubr.f32.gmra.mrb[0].mxu0 %v28
    %v96 = vpop.f32.mrb[0].mxu0
    %v97 = vadd.f32 %v25, %v96
    %v98 = vpop.f32.mrb[0].mxu0
    %99 = vdwg.mxu0
    %v100 = vmax.f32 %v97, 0.0
    %v101 = vld [vmem:[%s2] sm:$0xff]
    %v102 = vld [vmem:[%s2 + $0x8] sm:$0xff]
    %v103 = vld [vmem:[%s2 + $0x10] sm:$0xff]
    %v104 = vld [vmem:[%s2 + $0x18] sm:$0xff]
    %v105 = vld [vmem:[%s2 + $0x20] sm:$0x1]
    %v106 = vlaneseq
    %v107 = vshrl.u32 %v106, 7
    %v108 = vsub.s32 0, %v107
    %v109 = vrot.slane %v105, %v108
    %vm110 = vcmask 261120
    %v112 = vsel %vm110, %v100, 0
    %114 = vmatprep.subr.mxu0 0.0
    %115 = vmatpush1.msra.mxu0 %v101
    %116 = vmatprep.subr.mxu0 0.0
    %117 = vmatpush1.msra.mxu0 %v102
    %118 = vmatprep.subr.mxu0 0.0
    %119 = vmatpush1.msra.mxu0 %v103
    %120 = vmatprep.subr.mxu0 0.0
    %121 = vmatpush1.msra.mxu0 %v104
    %122 = vmatprep.subr.mxu0 0.0
    %123 = vmatpush1.msra.mxu0 0.0
    %124 = vmatprep.subr.mxu0 0.0
    %125 = vmatpush1.msra.mxu0 0.0
    %126 = vmatprep.subr.mxu0 0.0
    %127 = vmatpush1.msra.mxu0 0.0
    %128 = vmatprep.subr.mxu0 0.0
    %129 = vmatpush1.msra.mxu0 0.0
    %130 = vmatprep.subr.mxu0 0.0
    %131 = vmatpush1.msra.mxu0 0.0
    %132 = vmatprep.subr.mxu0 0.0
    %133 = vmatpush1.msra.mxu0 0.0
    %134 = vmatprep.subr.mxu0 0.0
    %135 = vmatpush1.msra.mxu0 0.0
    %136 = vmatprep.subr.mxu0 0.0
    %137 = vmatpush1.msra.mxu0 0.0
    %138 = vmatprep.subr.mxu0 0.0
    %139 = vmatpush1.msra.mxu0 0.0
    %140 = vmatprep.subr.mxu0 0.0
    %141 = vmatpush1.msra.mxu0 0.0
    %142 = vmatprep.subr.mxu0 0.0
    %143 = vmatpush1.msra.mxu0 0.0
    %144 = vmatprep.subr.mxu0 0.0
    %145 = vmatpush1.msra.mxu0 0.0
    %146 = vmatprep.subr.mxu0 0.0
    %147 = vmatpush1.msra.mxu0 0.0
    %148 = vmatprep.subr.mxu0 0.0
    %149 = vmatpush1.msra.mxu0 0.0
    %150 = vmatprep.subr.mxu0 0.0
    %151 = vmatpush1.msra.mxu0 0.0
    %152 = vmatprep.subr.mxu0 0.0
    %153 = vmatpush1.msra.mxu0 0.0
    %154 = vmatprep.subr.mxu0 0.0
    %155 = vmatpush1.msra.mxu0 0.0
    %156 = vmatprep.subr.mxu0 0.0
    %157 = vmatpush1.msra.mxu0 0.0
    %158 = vmatprep.subr.mxu0 0.0
    %159 = vmatpush1.msra.mxu0 0.0
    %160 = vmatprep.subr.mxu0 0.0
    %161 = vmatpush1.msra.mxu0 0.0
    %162 = vmatprep.subr.mxu0 0.0
    %163 = vmatpush1.msra.mxu0 0.0
    %164 = vmatprep.subr.mxu0 0.0
    %165 = vmatpush1.msra.mxu0 0.0
    %166 = vmatprep.subr.mxu0 0.0
    %167 = vmatpush1.msra.mxu0 0.0
    %168 = vmatprep.subr.mxu0 0.0
    %169 = vmatpush1.msra.mxu0 0.0
    %170 = vmatprep.subr.mxu0 0.0
    %171 = vmatpush1.msra.mxu0 0.0
    %172 = vmatprep.subr.mxu0 0.0
    %173 = vmatpush1.msra.mxu0 0.0
    %174 = vmatprep.subr.mxu0 0.0
    %175 = vmatpush1.msra.mxu0 0.0
    %176 = vmatprep.subr.mxu0 0.0
    %177 = vmatpush1.msra.mxu0 0.0
    %178 = vmatprep.mubr.f32.mxu0 0.0
    %179 = vmatmul.mubr.f32.gmra.mrb[0].mxu0 %v112
    %v180 = vpop.f32.mrb[0].mxu0
    %v181 = vadd.f32 %v109, %v180
    %v182 = vpop.f32.mrb[0].mxu0
    %183 = vdwg.mxu0
    %v184 = vtanh.pop %v181
    %v185 = vld [vmem:[%s3] sm:$0xff]
    %v186 = vld [vmem:[%s3 + $0x8] sm:$0xff]
    %v187 = vld [vmem:[%s3 + $0x10] sm:$0x1]
    %v188 = vlaneseq
    %v189 = vshrl.u32 %v188, 7
    %v190 = vsub.s32 0, %v189
    %v191 = vrot.slane %v187, %v190
    %v193 = vsel %vm26, %v184, 0
    %195 = vmatprep.subr.mxu0 0.0
    %196 = vmatpush1.msra.mxu0 %v185
    %197 = vmatprep.subr.mxu0 0.0
    %198 = vmatpush1.msra.mxu0 %v186
    %199 = vmatprep.subr.mxu0 0.0
    %200 = vmatpush1.msra.mxu0 0.0
    %201 = vmatprep.subr.mxu0 0.0
    %202 = vmatpush1.msra.mxu0 0.0
    %203 = vmatprep.subr.mxu0 0.0
    %204 = vmatpush1.msra.mxu0 0.0
    %205 = vmatprep.subr.mxu0 0.0
    %206 = vmatpush1.msra.mxu0 0.0
    %207 = vmatprep.subr.mxu0 0.0
    %208 = vmatpush1.msra.mxu0 0.0
    %209 = vmatprep.subr.mxu0 0.0
    %210 = vmatpush1.msra.mxu0 0.0
    %211 = vmatprep.subr.mxu0 0.0
    %212 = vmatpush1.msra.mxu0 0.0
    %213 = vmatprep.subr.mxu0 0.0
    %214 = vmatpush1.msra.mxu0 0.0
    %215 = vmatprep.subr.mxu0 0.0
    %216 = vmatpush1.msra.mxu0 0.0
    %217 = vmatprep.subr.mxu0 0.0
    %218 = vmatpush1.msra.mxu0 0.0
    %219 = vmatprep.subr.mxu0 0.0
    %220 = vmatpush1.msra.mxu0 0.0
    %221 = vmatprep.subr.mxu0 0.0
    %222 = vmatpush1.msra.mxu0 0.0
    %223 = vmatprep.subr.mxu0 0.0
    %224 = vmatpush1.msra.mxu0 0.0
    %225 = vmatprep.subr.mxu0 0.0
    %226 = vmatpush1.msra.mxu0 0.0
    %227 = vmatprep.subr.mxu0 0.0
    %228 = vmatpush1.msra.mxu0 0.0
    %229 = vmatprep.subr.mxu0 0.0
    %230 = vmatpush1.msra.mxu0 0.0
    %231 = vmatprep.subr.mxu0 0.0
    %232 = vmatpush1.msra.mxu0 0.0
    %233 = vmatprep.subr.mxu0 0.0
    %234 = vmatpush1.msra.mxu0 0.0
    %235 = vmatprep.subr.mxu0 0.0
    %236 = vmatpush1.msra.mxu0 0.0
    %237 = vmatprep.subr.mxu0 0.0
    %238 = vmatpush1.msra.mxu0 0.0
    %239 = vmatprep.subr.mxu0 0.0
    %240 = vmatpush1.msra.mxu0 0.0
    %241 = vmatprep.subr.mxu0 0.0
    %242 = vmatpush1.msra.mxu0 0.0
    %243 = vmatprep.subr.mxu0 0.0
    %244 = vmatpush1.msra.mxu0 0.0
    %245 = vmatprep.subr.mxu0 0.0
    %246 = vmatpush1.msra.mxu0 0.0
    %247 = vmatprep.subr.mxu0 0.0
    %248 = vmatpush1.msra.mxu0 0.0
    %249 = vmatprep.subr.mxu0 0.0
    %250 = vmatpush1.msra.mxu0 0.0
    %251 = vmatprep.subr.mxu0 0.0
    %252 = vmatpush1.msra.mxu0 0.0
    %253 = vmatprep.subr.mxu0 0.0
    %254 = vmatpush1.msra.mxu0 0.0
    %255 = vmatprep.subr.mxu0 0.0
    %256 = vmatpush1.msra.mxu0 0.0
    %257 = vmatprep.subr.mxu0 0.0
    %258 = vmatpush1.msra.mxu0 0.0
    %259 = vmatprep.mubr.f32.mxu0 0.0
    %260 = vmatmul.mubr.f32.gmra.mrb[0].mxu0 %v193
    %v261 = vpop.f32.mrb[0].mxu0
    %v262 = vadd.f32 %v191, %v261
    %v263 = vpop.f32.mrb[0].mxu0
    %264 = vdwg.mxu0
    %265 = vst [vmem:[#allocation2] sm:$0xff] %v262
    // Predicated region
    $region18: #{tpu_custom_call.1} parent=1 // pred_check
      _
    $region19: #{tpu_custom_call.1} parent=1 // pred_check_branch
      %267 = sbr.rel (0) target = $region21
    $region20: #{tpu_custom_call.1} parent=1 // pred_region
      %s269 = ssub.s32 128, 128
      %270 = vsyncadd [#allocation3], %s269
      %s272 = sshll.u32 [#allocation2], 4
      %s273 = int_to_ptr.vmem [resolvable:$true] %s272
      %275 = dma.vmem_to_hbm [thread:$0]  %s273, 128, %s4, [#allocation3]
    $region21: #{tpu_custom_call.1} parent=1 // pred_fallthru
      _
    // Predicated region
    $region22: #{tpu_custom_call.1} parent=1 // pred_check
      _
    $region23: #{tpu_custom_call.1} parent=1 // pred_check_branch
      %277 = sbr.rel (0) target = $region25
    $region24: #{tpu_custom_call.1} parent=1 // pred_region
      %278 = dma.done [#allocation3], 128
    $region25: #{tpu_custom_call.1} parent=1 // pred_fallthru
      _
    %279 = vsyncpa [#allocation3], 1

</llo_original>
